<compile_context>
chip_gen: v7x
topology: tpu7x:2x2x1
jax: 0.10.0
libtpu: 0.0.40
codegen_flags: <defaults>
</compile_context>

<pallas_src>
import functools

import jax
import jax.numpy as jnp
from jax.experimental import pallas as pl
from jax.experimental.pallas import tpu as pltpu


def qnetwork_kernel(x_ref, w1t_ref, b1_ref, w2t_ref, b2_ref, o_ref, *, l1_dtype):
    x = x_ref[...].astype(l1_dtype)          # (TB, 4)   batch on sublanes
    w1t = w1t_ref[...].astype(l1_dtype)      # (4, H)    PyTorch w1 transposed

    # ---- Layer 1 on the VPU: 4 broadcast multiply-adds (K=4), hidden is lane-dense ----
    h = x[:, 0:1] * w1t[0:1, :]
    for k in range(1, x.shape[1]):
        h = h + x[:, k:k + 1] * w1t[k:k + 1, :]
    h = jnp.maximum(h.astype(jnp.float32) + b1_ref[...], 0.0)        # (TB, H) + (1, H)

    # ---- Layer 2 on the (otherwise idle) MXU: (TB, H) @ (H, 2), f32 accumulation ----
    out = jnp.dot(h, w2t_ref[...], preferred_element_type=jnp.float32)
    o_ref[...] = (out + b2_ref[...]).astype(o_ref.dtype)             # (TB, 2) + (1, 2)


def _round_up(x, m):
    return ((x + m - 1) // m) * m


def qnetwork_forward(x, w1, b1, w2, b2, *, max_block_b=8192, min_rows_per_core=256,
                     l1_dtype=jnp.float32):
    """x: (B, 4) f32; w1: (H, 4); b1: (H,); w2: (2, H); b2: (2,)  ->  (B, 2)."""
    B, K = x.shape
    H = w1.shape[0]
    O = w2.shape[0]

    # ---- Adaptive batch tiling ----
    P = _round_up(B, 8)                       # sublane granularity
    n_blk = pl.cdiv(P, max_block_b)
    if n_blk == 1 and P >= 2 * min_rows_per_core:
        n_blk = 2                             # give both v7x TensorCores a block
    tb = _round_up(pl.cdiv(P, n_blk), 8)      # tile derived from block count -> minimal padding
    n_blk = pl.cdiv(P, tb)                    # last block may be partial (edge-masked by Pallas)

    # Wrapper pad only when B isn't a multiple of 8 (no transposes, no O(B) relayouts).
    x_in = x if P == B else jnp.pad(x, ((0, P - B), (0, 0)))

    w1t = w1.T                                # (K, H)  tiny one-time relayouts
    w2t = w2.T                                # (H, O)
    b1r = b1.reshape(1, H)
    b2r = b2.reshape(1, O)

    kernel = functools.partial(qnetwork_kernel, l1_dtype=l1_dtype)

    cost = pl.CostEstimate(
        flops=2 * P * (K * H + H * O),
        transcendentals=0,
        bytes_accessed=4 * (P * K + P * O + K * H + H + H * O + O),
    )

    out = pl.pallas_call(
        kernel,
        out_shape=jax.ShapeDtypeStruct((P, O), x.dtype),
        grid=(n_blk,),
        in_specs=[
            pl.BlockSpec((tb, K), lambda i: (i, 0)),   # x tile advances per grid step
            pl.BlockSpec((K, H), lambda i: (0, 0)),    # weights / biases stay VMEM-resident
            pl.BlockSpec((1, H), lambda i: (0, 0)),
            pl.BlockSpec((H, O), lambda i: (0, 0)),
            pl.BlockSpec((1, O), lambda i: (0, 0)),
        ],
        out_specs=pl.BlockSpec((tb, O), lambda i: (i, 0)),
        compiler_params=pltpu.CompilerParams(
            dimension_semantics=("parallel",),          # shard batch blocks across TCs
            vmem_limit_bytes=48 * 1024 * 1024,          # 8K-row tiles fit on v5e/v6e/v7x
        ),
        cost_estimate=cost,
    )(x_in, w1t, b1r, w2t, b2r)

    return out if P == B else out[:B]


def init_params(key, num_hidden=128):
    """Deterministic init mirroring nn.Linear (PyTorch-native (out, in) weight layout)."""
    k1, k2, k3, k4 = jax.random.split(key, 4)
    in1, out1 = 4, num_hidden
    in2, out2 = num_hidden, 2
    bound1 = 1.0 / jnp.sqrt(in1)
    bound2 = 1.0 / jnp.sqrt(in2)
    w1 = jax.random.uniform(k1, (out1, in1), jnp.float32, -bound1, bound1)
    b1 = jax.random.uniform(k2, (out1,), jnp.float32, -bound1, bound1)
    w2 = jax.random.uniform(k3, (out2, in2), jnp.float32, -bound2, bound2)
    b2 = jax.random.uniform(k4, (out2,), jnp.float32, -bound2, bound2)
    return w1, b1, w2, b2


if __name__ == "__main__":
    key = jax.random.PRNGKey(0)
    kx, kp = jax.random.split(key)

    num_hidden = 128
    w1, b1, w2, b2 = init_params(kp, num_hidden)

    def ref_fn(xx):
        return jnp.maximum(xx @ w1.T + b1[None, :], 0.0) @ w2.T + b2[None, :]

    # Small inference-style batch (single block, wrapper pads 2 -> 8 rows only).
    batch = 2
    x = jax.random.normal(kx, (batch, 4), dtype=jnp.float32)
    out = jax.block_until_ready(qnetwork_forward(x, w1, b1, w2, b2))
    assert out.shape == (batch, 2)
    assert jnp.allclose(out, ref_fn(x), atol=1e-5, rtol=1e-5)

    # Larger batch: no wrapper pad (3000 % 8 == 0), 2 parallel blocks of 1504 rows,
    # last block partial (edge-masked) -> exercises the multi-block / megacore path.
    x2 = jax.random.normal(kx, (3000, 4), dtype=jnp.float32)
    out2 = jax.block_until_ready(qnetwork_forward(x2, w1, b1, w2, b2))
    assert out2.shape == (3000, 2)
    assert jnp.allclose(out2, ref_fn(x2), atol=1e-4, rtol=1e-4)

    # Optional bf16 layer-1 path (VALU relief on v6e/v7x; slight deviation from f32).
    out3 = jax.block_until_ready(
        qnetwork_forward(x2, w1, b1, w2, b2, l1_dtype=jnp.bfloat16))
    assert out3.shape == (3000, 2)
    assert jnp.allclose(out3, ref_fn(x2), atol=3e-2, rtol=3e-2)

    print("KERNEL_OK")
</pallas_src>

<mosaic_0001>
module attributes {stable_mosaic.version = 11 : i64} {
  func.func @qnetwork_kernel(%arg0: i32, %arg1: memref<8x4xf32, #tpu.memory_space<vmem>>, %arg2: memref<4x128xf32, #tpu.memory_space<vmem>>, %arg3: memref<1x128xf32, #tpu.memory_space<vmem>>, %arg4: memref<128x2xf32, #tpu.memory_space<vmem>>, %arg5: memref<1x2xf32, #tpu.memory_space<vmem>>, %arg6: memref<8x2xf32, #tpu.memory_space<vmem>>) attributes {dimension_semantics = [#tpu.dimension_semantics<parallel>], iteration_bounds = array<i64: 1>, scalar_prefetch = 0 : i64, scratch_operands = 0 : i64, tpu.core_type = #tpu.core_type<tc>, window_params = [{transform_indices = @transform_0, window_bounds = array<i64: 8, 4>}, {pipeline_mode = #tpu.pipeline_mode<synchronous>, transform_indices = @transform_1, window_bounds = array<i64: 4, 128>}, {pipeline_mode = #tpu.pipeline_mode<synchronous>, transform_indices = @transform_2, window_bounds = array<i64: 1, 128>}, {pipeline_mode = #tpu.pipeline_mode<synchronous>, transform_indices = @transform_3, window_bounds = array<i64: 128, 2>}, {pipeline_mode = #tpu.pipeline_mode<synchronous>, transform_indices = @transform_4, window_bounds = array<i64: 1, 2>}, {transform_indices = @transform_5, window_bounds = array<i64: 8, 2>}]} {
    %c0 = arith.constant 0 : index
    %c0_0 = arith.constant 0 : index
    %0 = vector.load %arg1[%c0, %c0_0] : memref<8x4xf32, #tpu.memory_space<vmem>>, vector<8x4xf32>
    %c0_1 = arith.constant 0 : index
    %c0_2 = arith.constant 0 : index
    %1 = vector.load %arg2[%c0_1, %c0_2] : memref<4x128xf32, #tpu.memory_space<vmem>>, vector<4x128xf32>
    %2 = vector.extract_strided_slice %0 {offsets = [0, 0], sizes = [8, 1], strides = [1, 1]} : vector<8x4xf32> to vector<8x1xf32>
    %3 = vector.extract_strided_slice %1 {offsets = [0, 0], sizes = [1, 128], strides = [1, 1]} : vector<4x128xf32> to vector<1x128xf32>
    %4 = vector.broadcast %2 : vector<8x1xf32> to vector<8x128xf32>
    %5 = vector.broadcast %3 : vector<1x128xf32> to vector<8x128xf32>
    %6 = arith.mulf %4, %5 : vector<8x128xf32>
    %7 = vector.extract_strided_slice %0 {offsets = [0, 1], sizes = [8, 1], strides = [1, 1]} : vector<8x4xf32> to vector<8x1xf32>
    %8 = vector.extract_strided_slice %1 {offsets = [1, 0], sizes = [1, 128], strides = [1, 1]} : vector<4x128xf32> to vector<1x128xf32>
    %9 = vector.broadcast %7 : vector<8x1xf32> to vector<8x128xf32>
    %10 = vector.broadcast %8 : vector<1x128xf32> to vector<8x128xf32>
    %11 = arith.mulf %9, %10 : vector<8x128xf32>
    %12 = arith.addf %6, %11 : vector<8x128xf32>
    %13 = vector.extract_strided_slice %0 {offsets = [0, 2], sizes = [8, 1], strides = [1, 1]} : vector<8x4xf32> to vector<8x1xf32>
    %14 = vector.extract_strided_slice %1 {offsets = [2, 0], sizes = [1, 128], strides = [1, 1]} : vector<4x128xf32> to vector<1x128xf32>
    %15 = vector.broadcast %13 : vector<8x1xf32> to vector<8x128xf32>
    %16 = vector.broadcast %14 : vector<1x128xf32> to vector<8x128xf32>
    %17 = arith.mulf %15, %16 : vector<8x128xf32>
    %18 = arith.addf %12, %17 : vector<8x128xf32>
    %19 = vector.extract_strided_slice %0 {offsets = [0, 3], sizes = [8, 1], strides = [1, 1]} : vector<8x4xf32> to vector<8x1xf32>
    %20 = vector.extract_strided_slice %1 {offsets = [3, 0], sizes = [1, 128], strides = [1, 1]} : vector<4x128xf32> to vector<1x128xf32>
    %21 = vector.broadcast %19 : vector<8x1xf32> to vector<8x128xf32>
    %22 = vector.broadcast %20 : vector<1x128xf32> to vector<8x128xf32>
    %23 = arith.mulf %21, %22 : vector<8x128xf32>
    %24 = arith.addf %18, %23 : vector<8x128xf32>
    %c0_3 = arith.constant 0 : index
    %c0_4 = arith.constant 0 : index
    %25 = vector.load %arg3[%c0_3, %c0_4] : memref<1x128xf32, #tpu.memory_space<vmem>>, vector<1x128xf32>
    %26 = vector.broadcast %25 : vector<1x128xf32> to vector<8x128xf32>
    %27 = arith.addf %24, %26 : vector<8x128xf32>
    %cst = arith.constant 0.000000e+00 : f32
    %28 = vector.broadcast %cst : f32 to vector<8x128xf32>
    %29 = arith.maximumf %27, %28 : vector<8x128xf32>
    %c0_5 = arith.constant 0 : index
    %c0_6 = arith.constant 0 : index
    %30 = vector.load %arg4[%c0_5, %c0_6] : memref<128x2xf32, #tpu.memory_space<vmem>>, vector<128x2xf32>
    %cst_7 = arith.constant dense<0.000000e+00> : vector<8x2xf32>
    %31 = tpu.matmul %29, %30, %cst_7 {dimension_numbers = #tpu.dot_dimension_numbers<[1], [0], [0], [1], [0, 0, 1, 1], [], []>} : vector<8x128xf32>, vector<128x2xf32>, vector<8x2xf32> -> vector<8x2xf32>
    %c0_8 = arith.constant 0 : index
    %c0_9 = arith.constant 0 : index
    %32 = vector.load %arg5[%c0_8, %c0_9] : memref<1x2xf32, #tpu.memory_space<vmem>>, vector<1x2xf32>
    %33 = vector.broadcast %32 : vector<1x2xf32> to vector<8x2xf32>
    %34 = arith.addf %31, %33 : vector<8x2xf32>
    %c0_10 = arith.constant 0 : index
    %c0_11 = arith.constant 0 : index
    %35 = vector.load %arg6[%c0_10, %c0_11] : memref<8x2xf32, #tpu.memory_space<vmem>>, vector<8x2xf32>
    tpu.vector_store %arg6[%c0_10, %c0_11], %34 {strides = array<i32>} : memref<8x2xf32, #tpu.memory_space<vmem>>, vector<8x2xf32>,
    return
  }
  func.func @transform_0(%arg0: i32) -> (i32, i32) {
    %c0_i32 = arith.constant 0 : i32
    %c0_i32_0 = arith.constant 0 : i32
    return %arg0, %c0_i32 : i32, i32
  }
  func.func @transform_1(%arg0: i32) -> (i32, i32) {
    %c0_i32 = arith.constant 0 : i32
    %c0_i32_0 = arith.constant 0 : i32
    %c0_i32_1 = arith.constant 0 : i32
    return %c0_i32, %c0_i32_0 : i32, i32
  }
  func.func @transform_2(%arg0: i32) -> (i32, i32) {
    %c0_i32 = arith.constant 0 : i32
    %c0_i32_0 = arith.constant 0 : i32
    %c0_i32_1 = arith.constant 0 : i32
    return %c0_i32, %c0_i32_0 : i32, i32
  }
  func.func @transform_3(%arg0: i32) -> (i32, i32) {
    %c0_i32 = arith.constant 0 : i32
    %c0_i32_0 = arith.constant 0 : i32
    %c0_i32_1 = arith.constant 0 : i32
    return %c0_i32, %c0_i32_0 : i32, i32
  }
  func.func @transform_4(%arg0: i32) -> (i32, i32) {
    %c0_i32 = arith.constant 0 : i32
    %c0_i32_0 = arith.constant 0 : i32
    %c0_i32_1 = arith.constant 0 : i32
    return %c0_i32, %c0_i32_0 : i32, i32
  }
  func.func @transform_5(%arg0: i32) -> (i32, i32) {
    %c0_i32 = arith.constant 0 : i32
    %c0_i32_0 = arith.constant 0 : i32
    return %arg0, %c0_i32 : i32, i32
  }
}

</mosaic_0001>

<llo_original>
// kernel: tpu_custom_call.1
$region0: #{tpu_custom_call.1}
  #allocation0 [shape = 'u32[]', space=smem, size = 0x4, offset = 0x4, fixed_abs, tag = 'smem constant byte address 0x4 - core index']
  #allocation1 [shape = 'u32[144,128]{1,0:T(1,128)}', space=vmem, size = 0x12000, scoped, tag = 'internal scratch']
  %s0 = inlined_call_operand.vmem [shape: f32[8,4], index: 0, kind: input, shape index: {}]
  %s1 = inlined_call_operand.vmem [shape: f32[4,128], index: 1, kind: input, shape index: {}]
  %s2 = inlined_call_operand.vmem [shape: f32[1,128], index: 2, kind: input, shape index: {}]
  %s3 = inlined_call_operand.vmem [shape: f32[128,2], index: 3, kind: input, shape index: {}]
  %s4 = inlined_call_operand.vmem [shape: f32[1,2], index: 4, kind: input, shape index: {}]
  %s5 = inlined_call_operand.vmem [shape: f32[8,2], index: 5, kind: output, shape index: {}]
  %s6 = sld [smem:[#allocation0]]
  $region30: #{tpu_custom_call.1} parent=0
    _
  %s8 = ssub.s32 1, %s6
  %s9 = scalar_select 0, %s8, %s6
  // Predicated region
  $region2: #{tpu_custom_call.1} parent=0 // pred_check
    _
  $region3: #{tpu_custom_call.1} parent=0 // pred_check_branch
    %11 = sbr.rel (0) target = $region5
  $region4: #{tpu_custom_call.1} parent=0 // pred_region
    _
  $region5: #{tpu_custom_call.1} parent=0 // pred_fallthru
    _
  // Predicated region
  $region6: #{tpu_custom_call.1} parent=0 // pred_check
    _
  $region7: #{tpu_custom_call.1} parent=0 // pred_check_branch
    %13 = sbr.rel (0) target = $region9
  $region8: #{tpu_custom_call.1} parent=0 // pred_region
    _
  $region9: #{tpu_custom_call.1} parent=0 // pred_fallthru
    _
  // Predicated region
  $region10: #{tpu_custom_call.1} parent=0 // pred_check
    _
  $region11: #{tpu_custom_call.1} parent=0 // pred_check_branch
    %15 = sbr.rel (0) target = $region13
  $region12: #{tpu_custom_call.1} parent=0 // pred_region
    _
  $region13: #{tpu_custom_call.1} parent=0 // pred_fallthru
    _
  // Predicated region
  $region14: #{tpu_custom_call.1} parent=0 // pred_check
    _
  $region15: #{tpu_custom_call.1} parent=0 // pred_check_branch
    %17 = sbr.rel (0) target = $region17
  $region16: #{tpu_custom_call.1} parent=0 // pred_region
    _
  $region17: #{tpu_custom_call.1} parent=0 // pred_fallthru
    _
  // Predicated region
  $region18: #{tpu_custom_call.1} parent=0 // pred_check
    _
  $region19: #{tpu_custom_call.1} parent=0 // pred_check_branch
    %19 = sbr.rel (0) target = $region21
  $region20: #{tpu_custom_call.1} parent=0 // pred_region
    _
  $region21: #{tpu_custom_call.1} parent=0 // pred_fallthru
    _
  %v20 = vld [vmem:[%s0] sm:$0xff]
  %v21 = vld [vmem:[%s1] sm:$0xf]
  %23 = vset.pattern.permute.xlu0 0
  %24 = vperm.xlu0 %23, %v20
  %v25 = vpop.permute.xlu0 %24
  %v27 = vlaneseq
  %v28 = vshrl.u32 %v27, 7
  %v29 = vsub.s32 0, %v28
  %v30 = vrot.slane %v21, %v29
  %v31 = vmul.f32 %v25, %v30
  %32 = vset.pattern.permute.xlu0 1
  %33 = vperm.xlu0 %32, %v20
  %v34 = vpop.permute.xlu0 %33
  %v36 = vlaneseq
  %v37 = vshrl.u32 %v36, 7
  %v38 = vsub.s32 1, %v37
  %v39 = vrot.slane %v21, %v38
  %v40 = vmul.f32 %v34, %v39
  %v41 = vadd.f32 %v31, %v40
  %42 = vset.pattern.permute.xlu0 2
  %43 = vperm.xlu0 %42, %v20
  %v44 = vpop.permute.xlu0 %43
  %v46 = vlaneseq
  %v47 = vshrl.u32 %v46, 7
  %v48 = vsub.s32 2, %v47
  %v49 = vrot.slane %v21, %v48
  %v50 = vmul.f32 %v44, %v49
  %v51 = vadd.f32 %v41, %v50
  %52 = vset.pattern.permute.xlu0 3
  %53 = vperm.xlu0 %52, %v20
  %v54 = vpop.permute.xlu0 %53
  %v56 = vlaneseq
  %v57 = vshrl.u32 %v56, 7
  %v58 = vsub.s32 3, %v57
  %v59 = vrot.slane %v21, %v58
  %v60 = vmul.f32 %v54, %v59
  %v61 = vadd.f32 %v51, %v60
  %v62 = vld [vmem:[%s2] sm:$0x1]
  %v64 = vlaneseq
  %v65 = vshrl.u32 %v64, 7
  %v66 = vsub.s32 0, %v65
  %v67 = vrot.slane %v62, %v66
  %v69 = vadd.f32 %v61, %v67
  %v70 = vmax.f32 %v69, 0.0
  %v71 = vld [vmem:[%s3] sm:$0xff]
  %v72 = vld [vmem:[%s3 + $0x8] sm:$0xff]
  %v73 = vld [vmem:[%s3 + $0x10] sm:$0xff]
  %v74 = vld [vmem:[%s3 + $0x18] sm:$0xff]
  %v75 = vld [vmem:[%s3 + $0x20] sm:$0xff]
  %v76 = vld [vmem:[%s3 + $0x28] sm:$0xff]
  %v77 = vld [vmem:[%s3 + $0x30] sm:$0xff]
  %v78 = vld [vmem:[%s3 + $0x38] sm:$0xff]
  %v79 = vld [vmem:[%s3 + $0x40] sm:$0xff]
  %v80 = vld [vmem:[%s3 + $0x48] sm:$0xff]
  %v81 = vld [vmem:[%s3 + $0x50] sm:$0xff]
  %v82 = vld [vmem:[%s3 + $0x58] sm:$0xff]
  %v83 = vld [vmem:[%s3 + $0x60] sm:$0xff]
  %v84 = vld [vmem:[%s3 + $0x68] sm:$0xff]
  %v85 = vld [vmem:[%s3 + $0x70] sm:$0xff]
  %v86 = vld [vmem:[%s3 + $0x78] sm:$0xff]
  %v87 = vld [vmem:[%s4] sm:$0x1]
  %v89 = vlaneseq
  %v90 = vshrl.u32 %v89, 7
  %v91 = vsub.s32 0, %v90
  %v92 = vrot.slane %v87, %v91
  %94 = vmatprep.subr.mxu0 0.0
  %95 = vmatpush1.msra.mxu0 %v71
  %96 = vmatprep.subr.mxu0 0.0
  %97 = vmatpush1.msra.mxu0 %v72
  %98 = vmatprep.subr.mxu0 0.0
  %99 = vmatpush1.msra.mxu0 %v73
  %100 = vmatprep.subr.mxu0 0.0
  %101 = vmatpush1.msra.mxu0 %v74
  %102 = vmatprep.subr.mxu0 0.0
  %103 = vmatpush1.msra.mxu0 %v75
  %104 = vmatprep.subr.mxu0 0.0
  %105 = vmatpush1.msra.mxu0 %v76
  %106 = vmatprep.subr.mxu0 0.0
  %107 = vmatpush1.msra.mxu0 %v77
  %108 = vmatprep.subr.mxu0 0.0
  %109 = vmatpush1.msra.mxu0 %v78
  %110 = vmatprep.subr.mxu0 0.0
  %111 = vmatpush1.msra.mxu0 %v79
  %112 = vmatprep.subr.mxu0 0.0
  %113 = vmatpush1.msra.mxu0 %v80
  %114 = vmatprep.subr.mxu0 0.0
  %115 = vmatpush1.msra.mxu0 %v81
  %116 = vmatprep.subr.mxu0 0.0
  %117 = vmatpush1.msra.mxu0 %v82
  %118 = vmatprep.subr.mxu0 0.0
  %119 = vmatpush1.msra.mxu0 %v83
  %120 = vmatprep.subr.mxu0 0.0
  %121 = vmatpush1.msra.mxu0 %v84
  %122 = vmatprep.subr.mxu0 0.0
  %123 = vmatpush1.msra.mxu0 %v85
  %124 = vmatprep.subr.mxu0 0.0
  %125 = vmatpush1.msra.mxu0 %v86
  %126 = vmatprep.subr.mxu0 0.0
  %127 = vmatpush1.msra.mxu0 0.0
  %128 = vmatprep.subr.mxu0 0.0
  %129 = vmatpush1.msra.mxu0 0.0
  %130 = vmatprep.subr.mxu0 0.0
  %131 = vmatpush1.msra.mxu0 0.0
  %132 = vmatprep.subr.mxu0 0.0
  %133 = vmatpush1.msra.mxu0 0.0
  %134 = vmatprep.subr.mxu0 0.0
  %135 = vmatpush1.msra.mxu0 0.0
  %136 = vmatprep.subr.mxu0 0.0
  %137 = vmatpush1.msra.mxu0 0.0
  %138 = vmatprep.subr.mxu0 0.0
  %139 = vmatpush1.msra.mxu0 0.0
  %140 = vmatprep.subr.mxu0 0.0
  %141 = vmatpush1.msra.mxu0 0.0
  %142 = vmatprep.subr.mxu0 0.0
  %143 = vmatpush1.msra.mxu0 0.0
  %144 = vmatprep.subr.mxu0 0.0
  %145 = vmatpush1.msra.mxu0 0.0
  %146 = vmatprep.subr.mxu0 0.0
  %147 = vmatpush1.msra.mxu0 0.0
  %148 = vmatprep.subr.mxu0 0.0
  %149 = vmatpush1.msra.mxu0 0.0
  %150 = vmatprep.subr.mxu0 0.0
  %151 = vmatpush1.msra.mxu0 0.0
  %152 = vmatprep.subr.mxu0 0.0
  %153 = vmatpush1.msra.mxu0 0.0
  %154 = vmatprep.subr.mxu0 0.0
  %155 = vmatpush1.msra.mxu0 0.0
  %156 = vmatprep.subr.mxu0 0.0
  %157 = vmatpush1.msra.mxu0 0.0
  %158 = vmatprep.mubr.f32.mxu0 0.0
  %159 = vmatmul.mubr.f32.gmra.mrb[0].mxu0 %v70
  %v160 = vpop.f32.mrb[0].mxu0
  %v161 = vadd.f32 %v92, %v160
  %v162 = vpop.f32.mrb[0].mxu0
  %163 = vdwg.mxu0
  %vm164 = vcmask 15360
  %165 = vst.msk [vmem:[%s5] sm:$0xff] %vm164, %v161
  // Predicated region
  $region22: #{tpu_custom_call.1} parent=0 // pred_check
    _
  $region23: #{tpu_custom_call.1} parent=0 // pred_check_branch
    %167 = sbr.rel (0) target = $region25
  $region24: #{tpu_custom_call.1} parent=0 // pred_region
    _
  $region25: #{tpu_custom_call.1} parent=0 // pred_fallthru
    _
  // Predicated region
  $region26: #{tpu_custom_call.1} parent=0 // pred_check
    _
  $region27: #{tpu_custom_call.1} parent=0 // pred_check_branch
    %169 = sbr.rel (0) target = $region29
  $region28: #{tpu_custom_call.1} parent=0 // pred_region
    _
  $region29: #{tpu_custom_call.1} parent=0 // pred_fallthru
    _

</llo_original>
